<compile_context>
chip_gen: v7x
topology: tpu7x:2x2x1
jax: 0.10.0
libtpu: 0.0.40
codegen_flags: <defaults>
</compile_context>

<pallas_src>
import functools

import jax
import jax.numpy as jnp
from jax import lax
from jax.experimental import pallas as pl
from jax.experimental.pallas import tpu as pltpu


def _round_up(a: int, b: int) -> int:
    return ((a + b - 1) // b) * b


def _pick_tiles(n: int, d_pad: int, xbytes: int):
    """Choose (tq, tk, n_pad, vmem_need_bytes). tk always divides tq."""
    n8 = _round_up(n, 8)

    # Query tile: sets arithmetic intensity / acc reuse; sized by feature width.
    if d_pad <= 1024:
        tq = 512
    elif d_pad <= 4096:
        tq = 256
    else:
        tq = 128
    # Don't buy a bigger q tile with excessive row padding (beyond the 128-row
    # baseline and > ~12.5% of N).
    while (tq > 128 and _round_up(n8, tq) > _round_up(n8, 128)
           and _round_up(n8, tq) > (n8 * 9) // 8):
        tq //= 2
    tq = min(tq, n8)
    # Guarantee >= 2 query tiles when the problem allows it, so the "parallel"
    # q axis shards across v7x's two TensorCores (no-op cost on v5e/v6e).
    if n8 > 8 and _round_up(n8, tq) == tq:
        tq = _round_up((n8 + 1) // 2, 8)

    # Key tile: must divide tq (so both divide n_pad). 256 keeps the p@V
    # contraction dim MXU-efficient on v6e/v7x; fall back for wide D / small N.
    if tq % 256 == 0 and d_pad <= 4096:
        tk = 256
    elif tq % 128 == 0:
        tk = 128
    else:
        tk = tq

    # Shrink against a VMEM budget: key tile first, then query tile.
    def need(tq_, tk_):
        return (2 * tq_ * d_pad * (2 * xbytes + 2)   # x + out (orig dtype) + q_n bf16, 2x buffered
                + 4 * tk_ * d_pad * 2                # k_n + value streams (bf16), 2x buffered
                + tq_ * d_pad * 4 + tq_ * 4)         # f32 acc + l scratch

    budget = 20 << 20
    while need(tq, tk) > budget and tk > 128 and tk % 16 == 0:
        tk //= 2
    while need(tq, tk) > budget and tq > 128 and tq % 16 == 0:
        tq //= 2
        tk = min(tk, tq)

    n_pad = _round_up(n8, tq)
    return tq, tk, n_pad, need(tq, tk)


def _contranorm_kernel(xq_ref, qn_ref, kn_ref, xv_ref, o_ref, l_sc, acc_sc,
                       *, scale: float, pad_keys: int):
    ki = pl.program_id(1)

    @pl.when(ki == 0)
    def _init():
        l_sc[...] = jnp.zeros_like(l_sc)
        acc_sc[...] = jnp.zeros_like(acc_sc)

    # scores = q_n @ k_n^T : contraction over dim 1 of both operands (no XLU
    # transpose), bf16 operands, f32 accumulation on the MXU.  Scores are
    # cosine similarities (|s| <= ~1), so exp() cannot overflow and no online
    # max / rescale is needed.
    s = lax.dot_general(qn_ref[...], kn_ref[...], (((1,), (1,)), ((), ())),
                        preferred_element_type=jnp.float32)        # [TQ, TK]
    p = jnp.exp(s)                                                 # f32
    l_sc[...] += jnp.sum(p, axis=1, keepdims=True)
    acc_sc[...] += jnp.dot(p.astype(jnp.bfloat16), xv_ref[...],
                           preferred_element_type=jnp.float32)

    @pl.when(ki == pl.num_programs(1) - 1)
    def _finalize():
        # Padded key rows are exactly zero in both x_n and the value stream, so
        # each contributes exactly exp(0)=1 to l and exactly 0 to acc.  Correct
        # the softmax denominator once here instead of masking every tile.
        l = l_sc[...] - float(pad_keys)
        inv_l = pl.reciprocal(l, approx=True)
        xq = xq_ref[...].astype(jnp.float32)
        out = (1.0 + scale) * xq - scale * (acc_sc[...] * inv_l)
        o_ref[...] = out.astype(o_ref.dtype)


def contranorm(x: jax.Array, scale: float) -> jax.Array:
    """Pallas ContraNorm forward. x: [N, D]."""
    if scale == 0.0:
        return x
    n, d = x.shape
    d_pad = _round_up(d, 128)                       # lane-dense blocks / stores
    xbytes = jnp.dtype(x.dtype).itemsize
    tq, tk, n_pad, vmem_need = _pick_tiles(n, d_pad, xbytes)

    x_p = x
    if (n_pad, d_pad) != (n, d):
        x_p = jnp.pad(x, ((0, n_pad - n), (0, d_pad - d)))

    # One-shot precompute (plain JAX): row L2-normalized x in bf16 (query and
    # key streams) and the bf16 value stream.  Matches F.normalize(dim=1) in
    # f32; padded rows stay exactly zero.
    x32 = x_p.astype(jnp.float32)
    norms = jnp.sqrt(jnp.sum(x32 * x32, axis=1, keepdims=True))
    xn_p = (x32 / jnp.maximum(norms, 1e-12)).astype(jnp.bfloat16)
    xv_p = x_p.astype(jnp.bfloat16)

    kernel = functools.partial(_contranorm_kernel, scale=float(scale),
                               pad_keys=n_pad - n)

    vmem_limit = max(min(int(vmem_need * 1.5) + (2 << 20), 40 << 20), 16 << 20)

    out_p = pl.pallas_call(
        kernel,
        out_shape=jax.ShapeDtypeStruct((n_pad, d_pad), x.dtype),
        grid_spec=pltpu.PrefetchScalarGridSpec(
            num_scalar_prefetch=0,
            grid=(n_pad // tq, n_pad // tk),
            in_specs=[
                pl.BlockSpec((tq, d_pad), lambda qi, ki: (qi, 0)),  # x (epilogue), resident across ki
                pl.BlockSpec((tq, d_pad), lambda qi, ki: (qi, 0)),  # normalized q rows (bf16)
                pl.BlockSpec((tk, d_pad), lambda qi, ki: (ki, 0)),  # normalized k rows (bf16)
                pl.BlockSpec((tk, d_pad), lambda qi, ki: (ki, 0)),  # value rows (bf16)
            ],
            out_specs=pl.BlockSpec((tq, d_pad), lambda qi, ki: (qi, 0)),
            scratch_shapes=[
                pltpu.VMEM((tq, 1), jnp.float32),       # softmax denominator l
                pltpu.VMEM((tq, d_pad), jnp.float32),   # running numerator (sim @ x)
            ],
        ),
        compiler_params=pltpu.CompilerParams(
            dimension_semantics=("parallel", "arbitrary"),
            vmem_limit_bytes=vmem_limit,
        ),
    )(x_p, xn_p, xn_p, xv_p)

    if (n_pad, d_pad) != (n, d):
        out_p = out_p[:n, :d]
    return out_p


def _contranorm_ref(x: jax.Array, scale: float) -> jax.Array:
    """Pure-JAX f32 reference matching the PyTorch module."""
    if scale == 0.0:
        return x
    x32 = x.astype(jnp.float32)
    x_n = x32 / jnp.maximum(
        jnp.sqrt(jnp.sum(x32 * x32, axis=1, keepdims=True)), 1e-12)
    sim = jax.nn.softmax(x_n @ x_n.T, axis=1)
    return ((1.0 + scale) * x32 - scale * (sim @ x32)).astype(x.dtype)


if __name__ == "__main__":
    root = jax.random.PRNGKey(0)
    k_small, k_large = jax.random.split(root)
    scale = 0.5                                   # module hyperparameter

    # Small shape implied by the module's 2-D input (seq=8, hidden=32).
    N, D = 8, 32
    x = jax.random.normal(k_small, (N, D), dtype=jnp.float32)
    out = jax.block_until_ready(contranorm(x, scale))
    ref = jax.block_until_ready(_contranorm_ref(x, scale))
    assert out.shape == (N, D)
    assert jnp.max(jnp.abs(out - ref)) < 2e-2, "mismatch vs reference (small)"

    # scale == 0.0 path: identity.
    out0 = jax.block_until_ready(contranorm(x, 0.0))
    assert jnp.array_equal(out0, x)

    # Larger case: multi-tile grid, padded keys (denominator correction).
    N2, D2 = 300, 100
    x2 = jax.random.normal(k_large, (N2, D2), dtype=jnp.float32)
    out2 = jax.block_until_ready(contranorm(x2, scale))
    ref2 = jax.block_until_ready(_contranorm_ref(x2, scale))
    assert out2.shape == (N2, D2)
    assert jnp.max(jnp.abs(out2 - ref2)) < 2e-2, "mismatch vs reference (large)"

    print("KERNEL_OK")
</pallas_src>

<mosaic_0001>
module attributes {stable_mosaic.version = 11 : i64} {
  func.func @_contranorm_kernel(%arg0: i32, %arg1: i32, %arg2: memref<8x128xf32, #tpu.memory_space<vmem>>, %arg3: memref<8x128xbf16, #tpu.memory_space<vmem>>, %arg4: memref<8x128xbf16, #tpu.memory_space<vmem>>, %arg5: memref<8x128xbf16, #tpu.memory_space<vmem>>, %arg6: memref<8x128xf32, #tpu.memory_space<vmem>>, %arg7: memref<8x1xf32, #tpu.memory_space<vmem>>, %arg8: memref<8x128xf32, #tpu.memory_space<vmem>>) attributes {dimension_semantics = [#tpu.dimension_semantics<parallel>, #tpu.dimension_semantics<arbitrary>], iteration_bounds = array<i64: 1, 1>, scalar_prefetch = 0 : i64, scratch_operands = 2 : i64, tpu.core_type = #tpu.core_type<tc>, window_params = [{transform_indices = @transform_0, window_bounds = array<i64: 8, 128>}, {transform_indices = @transform_1, window_bounds = array<i64: 8, 128>}, {transform_indices = @transform_2, window_bounds = array<i64: 8, 128>}, {transform_indices = @transform_3, window_bounds = array<i64: 8, 128>}, {transform_indices = @transform_4, window_bounds = array<i64: 8, 128>}]} {
    %c0_i32 = arith.constant 0 : i32
    %0 = arith.cmpi eq, %arg1, %c0_i32 : i32
    %1 = arith.extui %0 : i1 to i32
    %c0_i32_0 = arith.constant 0 : i32
    %2 = arith.cmpi ne, %1, %c0_i32_0 : i32
    scf.if %2 {
      %cst_18 = arith.constant 0.000000e+00 : f32
      %21 = vector.broadcast %cst_18 : f32 to vector<8x1xf32>
      %c0_19 = arith.constant 0 : index
      %c0_20 = arith.constant 0 : index
      %22 = vector.load %arg7[%c0_19, %c0_20] : memref<8x1xf32, #tpu.memory_space<vmem>>, vector<8x1xf32>
      tpu.vector_store %arg7[%c0_19, %c0_20], %21 {strides = array<i32>} : memref<8x1xf32, #tpu.memory_space<vmem>>, vector<8x1xf32>,
      %cst_21 = arith.constant 0.000000e+00 : f32
      %23 = vector.broadcast %cst_21 : f32 to vector<8x128xf32>
      %c0_22 = arith.constant 0 : index
      %c0_23 = arith.constant 0 : index
      %24 = vector.load %arg8[%c0_22, %c0_23] : memref<8x128xf32, #tpu.memory_space<vmem>>, vector<8x128xf32>
      tpu.vector_store %arg8[%c0_22, %c0_23], %23 {strides = array<i32>} : memref<8x128xf32, #tpu.memory_space<vmem>>, vector<8x128xf32>,
    } else {
    }
    %c0 = arith.constant 0 : index
    %c0_1 = arith.constant 0 : index
    %3 = vector.load %arg3[%c0, %c0_1] : memref<8x128xbf16, #tpu.memory_space<vmem>>, vector<8x128xbf16>
    %c0_2 = arith.constant 0 : index
    %c0_3 = arith.constant 0 : index
    %4 = vector.load %arg4[%c0_2, %c0_3] : memref<8x128xbf16, #tpu.memory_space<vmem>>, vector<8x128xbf16>
    %cst = arith.constant dense<0.000000e+00> : vector<8x8xf32>
    %5 = tpu.matmul %3, %4, %cst {dimension_numbers = #tpu.dot_dimension_numbers<[1], [1], [0], [0], [0, 0, 1, 0], [], []>} : vector<8x128xbf16>, vector<8x128xbf16>, vector<8x8xf32> -> vector<8x8xf32>
    %6 = math.exp %5 : vector<8x8xf32>
    %c0_4 = arith.constant 0 : index
    %c0_5 = arith.constant 0 : index
    %7 = vector.load %arg7[%c0_4, %c0_5] : memref<8x1xf32, #tpu.memory_space<vmem>>, vector<8x1xf32>
    %cst_6 = arith.constant dense<0.000000e+00> : vector<8xf32>
    %8 = vector.multi_reduction <add>, %6, %cst_6 [1] : vector<8x8xf32> to vector<8xf32>
    %9 = vector.shape_cast %8 : vector<8xf32> to vector<8x1xf32>
    %10 = arith.addf %7, %9 : vector<8x1xf32>
    %c0_7 = arith.constant 0 : index
    %c0_8 = arith.constant 0 : index
    %11 = vector.load %arg7[%c0_7, %c0_8] : memref<8x1xf32, #tpu.memory_space<vmem>>, vector<8x1xf32>
    tpu.vector_store %arg7[%c0_7, %c0_8], %10 {strides = array<i32>} : memref<8x1xf32, #tpu.memory_space<vmem>>, vector<8x1xf32>,
    %c0_9 = arith.constant 0 : index
    %c0_10 = arith.constant 0 : index
    %12 = vector.load %arg8[%c0_9, %c0_10] : memref<8x128xf32, #tpu.memory_space<vmem>>, vector<8x128xf32>
    %13 = arith.truncf %6 : vector<8x8xf32> to vector<8x8xbf16>
    %c0_11 = arith.constant 0 : index
    %c0_12 = arith.constant 0 : index
    %14 = vector.load %arg5[%c0_11, %c0_12] : memref<8x128xbf16, #tpu.memory_space<vmem>>, vector<8x128xbf16>
    %cst_13 = arith.constant dense<0.000000e+00> : vector<8x128xf32>
    %15 = tpu.matmul %13, %14, %cst_13 {dimension_numbers = #tpu.dot_dimension_numbers<[1], [0], [0], [1], [0, 0, 1, 1], [], []>} : vector<8x8xbf16>, vector<8x128xbf16>, vector<8x128xf32> -> vector<8x128xf32>
    %16 = arith.addf %12, %15 : vector<8x128xf32>
    %c0_14 = arith.constant 0 : index
    %c0_15 = arith.constant 0 : index
    %17 = vector.load %arg8[%c0_14, %c0_15] : memref<8x128xf32, #tpu.memory_space<vmem>>, vector<8x128xf32>
    tpu.vector_store %arg8[%c0_14, %c0_15], %16 {strides = array<i32>} : memref<8x128xf32, #tpu.memory_space<vmem>>, vector<8x128xf32>,
    %c0_i32_16 = arith.constant 0 : i32
    %18 = arith.cmpi eq, %arg1, %c0_i32_16 : i32
    %19 = arith.extui %18 : i1 to i32
    %c0_i32_17 = arith.constant 0 : i32
    %20 = arith.cmpi ne, %19, %c0_i32_17 : i32
    scf.if %20 {
      %c0_18 = arith.constant 0 : index
      %c0_19 = arith.constant 0 : index
      %21 = vector.load %arg7[%c0_18, %c0_19] : memref<8x1xf32, #tpu.memory_space<vmem>>, vector<8x1xf32>
      %cst_20 = arith.constant 0.000000e+00 : f32
      %22 = vector.broadcast %cst_20 : f32 to vector<8x1xf32>
      %23 = arith.subf %21, %22 : vector<8x1xf32>
      %24 = tpu.reciprocal %23 {approx = true} : vector<8x1xf32> -> vector<8x1xf32>
      %c0_21 = arith.constant 0 : index
      %c0_22 = arith.constant 0 : index
      %25 = vector.load %arg2[%c0_21, %c0_22] : memref<8x128xf32, #tpu.memory_space<vmem>>, vector<8x128xf32>
      %cst_23 = arith.constant 1.500000e+00 : f32
      %26 = vector.broadcast %cst_23 : f32 to vector<8x128xf32>
      %27 = arith.mulf %26, %25 : vector<8x128xf32>
      %c0_24 = arith.constant 0 : index
      %c0_25 = arith.constant 0 : index
      %28 = vector.load %arg8[%c0_24, %c0_25] : memref<8x128xf32, #tpu.memory_space<vmem>>, vector<8x128xf32>
      %29 = vector.broadcast %24 : vector<8x1xf32> to vector<8x128xf32>
      %30 = arith.mulf %28, %29 : vector<8x128xf32>
      %cst_26 = arith.constant 5.000000e-01 : f32
      %31 = vector.broadcast %cst_26 : f32 to vector<8x128xf32>
      %32 = arith.mulf %31, %30 : vector<8x128xf32>
      %33 = arith.subf %27, %32 : vector<8x128xf32>
      %c0_27 = arith.constant 0 : index
      %c0_28 = arith.constant 0 : index
      %34 = vector.load %arg6[%c0_27, %c0_28] : memref<8x128xf32, #tpu.memory_space<vmem>>, vector<8x128xf32>
      tpu.vector_store %arg6[%c0_27, %c0_28], %33 {strides = array<i32>} : memref<8x128xf32, #tpu.memory_space<vmem>>, vector<8x128xf32>,
    } else {
    }
    return
  }
  func.func @transform_0(%arg0: i32, %arg1: i32) -> (i32, i32) {
    %c0_i32 = arith.constant 0 : i32
    %c0_i32_0 = arith.constant 0 : i32
    return %arg0, %c0_i32 : i32, i32
  }
  func.func @transform_1(%arg0: i32, %arg1: i32) -> (i32, i32) {
    %c0_i32 = arith.constant 0 : i32
    %c0_i32_0 = arith.constant 0 : i32
    return %arg0, %c0_i32 : i32, i32
  }
  func.func @transform_2(%arg0: i32, %arg1: i32) -> (i32, i32) {
    %c0_i32 = arith.constant 0 : i32
    %c0_i32_0 = arith.constant 0 : i32
    return %arg1, %c0_i32 : i32, i32
  }
  func.func @transform_3(%arg0: i32, %arg1: i32) -> (i32, i32) {
    %c0_i32 = arith.constant 0 : i32
    %c0_i32_0 = arith.constant 0 : i32
    return %arg1, %c0_i32 : i32, i32
  }
  func.func @transform_4(%arg0: i32, %arg1: i32) -> (i32, i32) {
    %c0_i32 = arith.constant 0 : i32
    %c0_i32_0 = arith.constant 0 : i32
    return %arg0, %c0_i32 : i32, i32
  }
}

</mosaic_0001>

<llo_original>
// kernel: tpu_custom_call.1
$region0: #{tpu_custom_call.1}
  #allocation0 [shape = 'u32[]', space=smem, size = 0x4, offset = 0x4, fixed_abs, tag = 'smem constant byte address 0x4 - core index']
  #allocation1 [shape = 'u32[144,128]{1,0:T(1,128)}', space=vmem, size = 0x12000, scoped, tag = 'internal scratch']
  #allocation2 [shape = 'f32[8,1]{1,0:T(8,128)}', space=vmem, size = 0x1000, scoped, tag = 'scratch operand']
  #allocation3 [shape = 'f32[8,128]{1,0:T(8,128)}', space=vmem, size = 0x1000, scoped, tag = 'scratch operand']
  %s0 = inlined_call_operand.hbm [shape: f32[8,128], index: 0, kind: input, shape index: {}]
  %s1 = inlined_call_operand.hbm [shape: bf16[8,128], index: 1, kind: input, shape index: {}]
  %s2 = inlined_call_operand.vmem [shape: bf16[8,128], index: 2, kind: input, shape index: {}]
  %s3 = inlined_call_operand.vmem [shape: bf16[8,128], index: 3, kind: input, shape index: {}]
  %s4 = inlined_call_operand.hbm [shape: f32[8,128], index: 4, kind: output, shape index: {}]
  %s5 = sld [smem:[#allocation0]]
  $region42: #{tpu_custom_call.1} parent=0
    _
  %s7 = ssub.s32 1, %s5
  %s8 = scalar_select 0, %s7, %s5
  $region1: #{tpu_custom_call.1} parent=0
    #allocation4 [shape = 'u8[4096]{0}', space=vmem, size = 0x1000, scoped, tag = 'input window, operand 0, single buffered']
    #allocation5 [shape = 's32[1]{0}', space=sflag, size = 0x4, scoped, tag = 'scoped memory for tpu_custom_call.1']
    #allocation6 [shape = 's32[1]{0}', space=sflag, size = 0x4, scoped, tag = 'scoped memory for tpu_custom_call.1']
    #allocation7 [shape = 'u8[2048]{0}', space=vmem, size = 0x800, scoped, tag = 'input window, operand 1, single buffered']
    #allocation8 [shape = 's32[1]{0}', space=sflag, size = 0x4, scoped, tag = 'scoped memory for tpu_custom_call.1']
    #allocation9 [shape = 'u8[4096]{0}', space=vmem, size = 0x1000, scoped, tag = 'output window, operand 0, single buffered']
    %9 = vsyncpa [#allocation5], 0
    %10 = vsyncpa [#allocation8], 0
    %11 = vsyncpa [#allocation6], 0
    // Predicated region
    $region2: #{tpu_custom_call.1} parent=1 // pred_check
      _
    $region3: #{tpu_custom_call.1} parent=1 // pred_check_branch
      %13 = sbr.rel (0) target = $region5
    $region4: #{tpu_custom_call.1} parent=1 // pred_region
      %s15 = ssub.s32 128, 128
      %16 = vsyncadd [#allocation5], %s15
      %s18 = sshll.u32 [#allocation4], 4
      %s19 = int_to_ptr.vmem [resolvable:$true] %s18
      %21 = dma.hbm_to_vmem [thread:$0]  %s0, 128, %s19, [#allocation5]
    $region5: #{tpu_custom_call.1} parent=1 // pred_fallthru
      _
    // Predicated region
    $region6: #{tpu_custom_call.1} parent=1 // pred_check
      _
    $region7: #{tpu_custom_call.1} parent=1 // pred_check_branch
      %23 = sbr.rel (0) target = $region9
    $region8: #{tpu_custom_call.1} parent=1 // pred_region
      %s25 = ssub.s32 64, 64
      %26 = vsyncadd [#allocation8], %s25
      %s28 = sshll.u32 [#allocation7], 4
      %s29 = int_to_ptr.vmem [resolvable:$true] %s28
      %31 = dma.hbm_to_vmem [thread:$0]  %s1, 64, %s29, [#allocation8]
    $region9: #{tpu_custom_call.1} parent=1 // pred_fallthru
      _
    // Predicated region
    $region10: #{tpu_custom_call.1} parent=1 // pred_check
      _
    $region11: #{tpu_custom_call.1} parent=1 // pred_check_branch
      %33 = sbr.rel (0) target = $region13
    $region12: #{tpu_custom_call.1} parent=1 // pred_region
      _
    $region13: #{tpu_custom_call.1} parent=1 // pred_fallthru
      _
    // Predicated region
    $region14: #{tpu_custom_call.1} parent=1 // pred_check
      _
    $region15: #{tpu_custom_call.1} parent=1 // pred_check_branch
      %35 = sbr.rel (0) target = $region17
    $region16: #{tpu_custom_call.1} parent=1 // pred_region
      _
    $region17: #{tpu_custom_call.1} parent=1 // pred_fallthru
      _
    // Predicated region
    $region18: #{tpu_custom_call.1} parent=1 // pred_check
      _
    $region19: #{tpu_custom_call.1} parent=1 // pred_check_branch
      %37 = sbr.rel (0) target = $region21
    $region20: #{tpu_custom_call.1} parent=1 // pred_region
      %38 = dma.done [#allocation5], 128
    $region21: #{tpu_custom_call.1} parent=1 // pred_fallthru
      _
    // Predicated region
    $region22: #{tpu_custom_call.1} parent=1 // pred_check
      _
    $region23: #{tpu_custom_call.1} parent=1 // pred_check_branch
      %40 = sbr.rel (0) target = $region25
    $region24: #{tpu_custom_call.1} parent=1 // pred_region
      %41 = dma.done [#allocation8], 64
    $region25: #{tpu_custom_call.1} parent=1 // pred_fallthru
      _
    %p43 = scmp.eq.s32.totalorder 0, 0
    // Predicated region
    $region26: #{tpu_custom_call.1} parent=1 // pred_check
      %p44 = pneg %p43
    $region27: #{tpu_custom_call.1} parent=1 // pred_check_branch
      %46 = sbr.rel (%p44) target = $region29
    $region28: #{tpu_custom_call.1} parent=1 // pred_region
      %vm47 = vcmask 7168
      %48 = vst.msk [vmem:[#allocation2] sm:$0xff] %vm47, 0.0
      %49 = vst [vmem:[#allocation3] sm:$0xff] 0.0
    $region29: #{tpu_custom_call.1} parent=1 // pred_fallthru
      _
    %v50 = vld [vmem:[#allocation7] sm:$0xf]
    %v51 = vld [vmem:[%s2] sm:$0xf]
    %52 = vmatprep.subr.bf16.mxu0 0
    %53 = vmatpush1.bf16.xpose.msra.mxu0 %v51
    %54 = vmatprep.subr.bf16.mxu0 0
    %55 = vmatpush1.bf16.xpose.msra.mxu0 0
    %56 = vmatprep.subr.bf16.mxu0 0
    %57 = vmatpush1.bf16.xpose.msra.mxu0 0
    %58 = vmatprep.subr.bf16.mxu0 0
    %59 = vmatpush1.bf16.xpose.msra.mxu0 0
    %60 = vmatprep.subr.bf16.mxu0 0
    %61 = vmatpush1.bf16.xpose.msra.mxu0 0
    %62 = vmatprep.subr.bf16.mxu0 0
    %63 = vmatpush1.bf16.xpose.msra.mxu0 0
    %64 = vmatprep.subr.bf16.mxu0 0
    %65 = vmatpush1.bf16.xpose.msra.mxu0 0
    %66 = vmatprep.subr.bf16.mxu0 0
    %67 = vmatpush1.bf16.xpose.msra.mxu0 0
    %68 = vmatprep.subr.bf16.mxu0 0
    %69 = vmatpush1.bf16.xpose.msra.mxu0 0
    %70 = vmatprep.subr.bf16.mxu0 0
    %71 = vmatpush1.bf16.xpose.msra.mxu0 0
    %72 = vmatprep.subr.bf16.mxu0 0
    %73 = vmatpush1.bf16.xpose.msra.mxu0 0
    %74 = vmatprep.subr.bf16.mxu0 0
    %75 = vmatpush1.bf16.xpose.msra.mxu0 0
    %76 = vmatprep.subr.bf16.mxu0 0
    %77 = vmatpush1.bf16.xpose.msra.mxu0 0
    %78 = vmatprep.subr.bf16.mxu0 0
    %79 = vmatpush1.bf16.xpose.msra.mxu0 0
    %80 = vmatprep.subr.bf16.mxu0 0
    %81 = vmatpush1.bf16.xpose.msra.mxu0 0
    %82 = vmatprep.subr.bf16.mxu0 0
    %83 = vmatpush1.bf16.xpose.msra.mxu0 0
    %84 = vmatprep.mubr.bf16.mxu0 0
    %85 = vmatmul.mubr.bf16.gmra.mrb[0].mxu0 %v50
    %v86 = vpop.f32.mrb[0].mxu0
    %v87 = vadd.f32 0.0, %v86
    %v88 = vpop.f32.mrb[0].mxu0
    %v89 = vpop.f32.mrb[0].mxu0
    %v90 = vpop.f32.mrb[0].mxu0
    %91 = vdwg.mxu0
    %v92 = vmul.f32 %v87, 1.442695
    %v93 = vpow.pop %v92
    %v94 = vld [vmem:[#allocation2] sm:$0xff]
    %vm95 = vcmask 64512
    %v96 = vsel %vm95, %v93, 0.0
    %97 = vadd.xlane.f32.xlu0 %v96
    %v98 = vpop.xlane.xlu0 %97
    %v99 = vadd.f32 %v94, %v98
    %vm100 = vcmask 7168
    %101 = vst.msk [vmem:[#allocation2] sm:$0xff] %vm100, %v99
    %v102 = vld [vmem:[#allocation3] sm:$0xff]
    %v103 = vpack.c.bf16 %v93, %v93
    %v104 = vld [vmem:[%s3] sm:$0xf]
    %v106 = vsel %vm95, %v103, 0
    %vm108 = vcmask 1043456
    %v110 = vsel %vm108, %v104, 0
    %112 = vmatprep.subr.bf16.mxu0 0
    %113 = vmatpush1.bf16.msra.mxu0 %v110
    %114 = vmatprep.subr.bf16.mxu0 0
    %115 = vmatpush1.bf16.msra.mxu0 0
    %116 = vmatprep.subr.bf16.mxu0 0
    %117 = vmatpush1.bf16.msra.mxu0 0
    %118 = vmatprep.subr.bf16.mxu0 0
    %119 = vmatpush1.bf16.msra.mxu0 0
    %120 = vmatprep.subr.bf16.mxu0 0
    %121 = vmatpush1.bf16.msra.mxu0 0
    %122 = vmatprep.subr.bf16.mxu0 0
    %123 = vmatpush1.bf16.msra.mxu0 0
    %124 = vmatprep.subr.bf16.mxu0 0
    %125 = vmatpush1.bf16.msra.mxu0 0
    %126 = vmatprep.subr.bf16.mxu0 0
    %127 = vmatpush1.bf16.msra.mxu0 0
    %128 = vmatprep.subr.bf16.mxu0 0
    %129 = vmatpush1.bf16.msra.mxu0 0
    %130 = vmatprep.subr.bf16.mxu0 0
    %131 = vmatpush1.bf16.msra.mxu0 0
    %132 = vmatprep.subr.bf16.mxu0 0
    %133 = vmatpush1.bf16.msra.mxu0 0
    %134 = vmatprep.subr.bf16.mxu0 0
    %135 = vmatpush1.bf16.msra.mxu0 0
    %136 = vmatprep.subr.bf16.mxu0 0
    %137 = vmatpush1.bf16.msra.mxu0 0
    %138 = vmatprep.subr.bf16.mxu0 0
    %139 = vmatpush1.bf16.msra.mxu0 0
    %140 = vmatprep.subr.bf16.mxu0 0
    %141 = vmatpush1.bf16.msra.mxu0 0
    %142 = vmatprep.subr.bf16.mxu0 0
    %143 = vmatpush1.bf16.msra.mxu0 0
    %144 = vmatprep.mubr.bf16.mxu0 0
    %145 = vmatmul.mubr.bf16.gmra.mrb[0].mxu0 %v106
    %v146 = vpop.f32.mrb[0].mxu0
    %v147 = vadd.f32 0.0, %v146
    %v148 = vpop.f32.mrb[0].mxu0
    %v149 = vpop.f32.mrb[0].mxu0
    %v150 = vpop.f32.mrb[0].mxu0
    %151 = vdwg.mxu0
    %v152 = vadd.f32 %v102, %v147
    %153 = vst [vmem:[#allocation3] sm:$0xff] %v152
    // Predicated region
    $region30: #{tpu_custom_call.1} parent=1 // pred_check
      %p154 = pneg %p43
    $region31: #{tpu_custom_call.1} parent=1 // pred_check_branch
      %156 = sbr.rel (%p154) target = $region33
    $region32: #{tpu_custom_call.1} parent=1 // pred_region
      %v157 = vld [vmem:[#allocation2] sm:$0xff]
      %v158 = vrcp.pop %v157
      %v159 = vld [vmem:[#allocation4] sm:$0xff]
      %v160 = vmul.f32 %v159, 1.5
      %v161 = vld [vmem:[#allocation3] sm:$0xff]
      %163 = vset.pattern.permute.xlu0 0
      %164 = vperm.xlu0 %163, %v158
      %v165 = vpop.permute.xlu0 %164
      %v167 = vmul.f32 %v161, %v165
      %v168 = vmul.f32 %v167, 0.5
      %v169 = vsub.f32 %v160, %v168
      %170 = vst [vmem:[#allocation9] sm:$0xff] %v169
    $region33: #{tpu_custom_call.1} parent=1 // pred_fallthru
      _
    // Predicated region
    $region34: #{tpu_custom_call.1} parent=1 // pred_check
      _
    $region35: #{tpu_custom_call.1} parent=1 // pred_check_branch
      %172 = sbr.rel (0) target = $region37
    $region36: #{tpu_custom_call.1} parent=1 // pred_region
      %s174 = ssub.s32 128, 128
      %175 = vsyncadd [#allocation6], %s174
      %s177 = sshll.u32 [#allocation9], 4
      %s178 = int_to_ptr.vmem [resolvable:$true] %s177
      %180 = dma.vmem_to_hbm [thread:$0]  %s178, 128, %s4, [#allocation6]
    $region37: #{tpu_custom_call.1} parent=1 // pred_fallthru
      _
    // Predicated region
    $region38: #{tpu_custom_call.1} parent=1 // pred_check
      _
    $region39: #{tpu_custom_call.1} parent=1 // pred_check_branch
      %182 = sbr.rel (0) target = $region41
    $region40: #{tpu_custom_call.1} parent=1 // pred_region
      %183 = dma.done [#allocation6], 128
    $region41: #{tpu_custom_call.1} parent=1 // pred_fallthru
      _
    %184 = vsyncpa [#allocation5], 1
    %185 = vsyncpa [#allocation8], 1
    %186 = vsyncpa [#allocation6], 1

</llo_original>
